<compile_context>
chip_gen: v7x
topology: tpu7x:2x2x1
jax: 0.10.0
libtpu: 0.0.40
codegen_flags: <defaults>
</compile_context>

<pallas_src>
import jax
import jax.numpy as jnp
from jax.experimental import pallas as pl
from jax.experimental.pallas import tpu as pltpu


def _pfn_step_kernel(xproj_ref, wh_ref, tri_ref, wt_ref, bt_ref,
                     h0_ref, c0_ref, out_ref, h_sc, c_sc):
    B = h0_ref.shape[0]
    H = h0_ref.shape[1]

    # Load the initial recurrent state into scratch on the first step.
    @pl.when(pl.program_id(0) == 0)
    def _():
        h_sc[...] = h0_ref[...]
        c_sc[...] = c0_ref[...]

    h_in = h_sc[...]
    c_in = c_sc[...]

    # In-loop gate matmul is only [B,H] @ [H,5H]; x @ W_x + b_in + b_h was
    # precomputed for the whole sequence and arrives via xproj_ref.
    gates = xproj_ref[...] + jnp.dot(h_in, wh_ref[...],
                                     preferred_element_type=jnp.float32)

    # Column layout (reordered in prepare_pfn_params):
    #   lanes [0, 4H)  -> eg_cin | rg_cin | eg_c | rg_c  (aligned slice)
    #   lanes [4H, 5H) -> c_raw (starts on a 128-lane boundary for H = 32)
    g4flat = gates[:, :4 * H]
    c_raw = gates[:, 4 * H:]

    # Stack the 4 gates along sublanes -> one softmax/cumsum pass on [4B, H].
    g4 = jnp.concatenate([g4flat[:, 0 * H:1 * H],
                          g4flat[:, 1 * H:2 * H],
                          g4flat[:, 2 * H:3 * H],
                          g4flat[:, 3 * H:4 * H]], axis=0)        # [4B, H]

    m = jnp.max(g4, axis=-1, keepdims=True)
    e = jnp.exp(g4 - m)
    # cumsum via upper-triangular ones matmul; the softmax denominator equals
    # the last cumsum column, so there is no separate cross-lane sum and the
    # EUP reciprocal overlaps the MXU pop.  One Newton step -> ~f32 accuracy.
    cs_un = jnp.dot(e, tri_ref[...], preferred_element_type=jnp.float32)
    denom = cs_un[:, H - 1:H]
    r = pl.reciprocal(denom, approx=True)
    r = r * (2.0 - denom * r)
    cs = cs_un * r                                                # [4B, H]

    eg_cin = 1.0 - cs[0 * B:1 * B]
    rg_cin = cs[1 * B:2 * B]
    eg_c = 1.0 - cs[2 * B:3 * B]
    rg_c = cs[3 * B:4 * B]
    c = jnp.tanh(c_raw)

    # --- gate mixing ---------------------------------------------------------
    overlap_c = rg_c * eg_c
    upper_c = rg_c - overlap_c
    downer_c = eg_c - overlap_c
    overlap_cin = rg_cin * eg_cin
    upper_cin = rg_cin - overlap_cin
    downer_cin = eg_cin - overlap_cin

    share = overlap_cin * c_in + overlap_c * c
    c_re = upper_cin * c_in + upper_c * c + share
    c_ner = downer_cin * c_in + downer_c * c + share
    c_share = share

    h_re = jnp.tanh(c_re)
    h_ner = jnp.tanh(c_ner)
    h_share = jnp.tanh(c_share)

    # Output transform: three accumulating [B,H]@[H,H] matmuls on sublane-
    # aligned weight slices (no unaligned lane concat of [c_re|c_ner|c_share]).
    wt = wt_ref[...]                                              # [3H, H]
    c_out = (jnp.dot(c_re, wt[0 * H:1 * H], preferred_element_type=jnp.float32)
             + jnp.dot(c_ner, wt[1 * H:2 * H], preferred_element_type=jnp.float32)
             + jnp.dot(c_share, wt[2 * H:3 * H], preferred_element_type=jnp.float32)
             + bt_ref[...])
    h_out = jnp.tanh(c_out)

    # Single per-step output slab, written once.  (Padding it to a multiple of
    # 128 lanes was considered; at [8, 160] the masked 32-lane tail is noise.)
    out_ref[...] = jnp.concatenate(
        [h_out, c_out, h_ner, h_re, h_share], axis=-1).astype(out_ref.dtype)

    # Carry the recurrent state to the next grid step.
    h_sc[...] = h_out
    c_sc[...] = c_out


def prepare_pfn_params(params, dropconnect=0.1):
    """One-time weight prep (hoisted out of the per-call path).

    Returns:
      w_x : [IN, 5H]  input_transform.T, gate columns reordered
      b   : [1, 5H]   b_in + b_h, reordered (folded into the x-projection)
      w_h : [H, 5H]   scaled hidden_transform.T, reordered
      w_t : [3H, H]   transform.T
      b_t : [1, H]
      tri : [H, H]    upper-triangular ones (cumsum matmul operand)
    """
    w_in, b_in = params["input_transform"]      # [5H, IN], [5H]
    w_h, b_h = params["hidden_transform"]       # [5H, H],  [5H]
    w_t, b_t = params["transform"]              # [H, 3H],  [H]
    H = w_h.shape[1]

    # Original chunk order is (c, eg_cin, rg_cin, eg_c, rg_c); move the 4
    # cumsoftmax gates to the front so they occupy lanes [0, 4H) and c_raw
    # starts on a 128-lane boundary (for H = 32).
    perm = jnp.concatenate([jnp.arange(H, 5 * H), jnp.arange(0, H)])

    w_x = jnp.asarray(w_in, jnp.float32)[perm].T                        # [IN, 5H]
    b = jnp.asarray(b_in + b_h, jnp.float32)[perm][None, :]             # [1, 5H]
    # Eval-mode LinearDropConnect: weight * (1 - dropout).
    w_hh = (jnp.asarray(w_h, jnp.float32) * (1.0 - dropconnect))[perm].T  # [H, 5H]
    w_tt = jnp.asarray(w_t, jnp.float32).T                              # [3H, H]
    b_tt = jnp.asarray(b_t, jnp.float32)[None, :]                       # [1, H]

    idx = jnp.arange(H)
    tri = (idx[:, None] <= idx[None, :]).astype(jnp.float32)            # [H, H]

    return {"w_x": w_x, "b": b, "w_h": w_hh, "w_t": w_tt, "b_t": b_tt,
            "tri": tri}


@jax.jit
def pfn_unit_scan(x_seq, h0, c0, prepared):
    """Run PfnUnit over a [T, B, IN] sequence inside one pallas_call.

    Returns ((h_out, c_out), (h_ner, h_re, h_share)), each [T, B, H].
    """
    T, B, IN = x_seq.shape
    H = h0.shape[1]
    G = 5 * H

    # Hoist the x-projection (and both biases) out of the recurrence: one big
    # XLA matmul over the whole sequence.
    xproj = (x_seq.reshape(T * B, IN) @ prepared["w_x"]
             + prepared["b"]).reshape(T, B, G)

    def full2d(a):
        return pl.BlockSpec(a.shape, lambda t: (0, 0))

    out = pl.pallas_call(
        _pfn_step_kernel,
        grid=(T,),
        in_specs=[pl.BlockSpec((None, B, G), lambda t: (t, 0, 0)),   # xproj[t]
                  full2d(prepared["w_h"]),
                  full2d(prepared["tri"]),
                  full2d(prepared["w_t"]),
                  full2d(prepared["b_t"]),
                  full2d(h0),
                  full2d(c0)],
        out_specs=pl.BlockSpec((None, B, G), lambda t: (t, 0, 0)),
        out_shape=jax.ShapeDtypeStruct((T, B, G), jnp.float32),
        scratch_shapes=[pltpu.VMEM((B, H), jnp.float32),   # carried h
                        pltpu.VMEM((B, H), jnp.float32)],  # carried c
        compiler_params=pltpu.CompilerParams(
            dimension_semantics=("arbitrary",)),           # true recurrence
    )(xproj, prepared["w_h"], prepared["tri"], prepared["w_t"],
      prepared["b_t"], h0, c0)

    h_out = out[..., 0 * H:1 * H]
    c_out = out[..., 1 * H:2 * H]
    h_ner = out[..., 2 * H:3 * H]
    h_re = out[..., 3 * H:4 * H]
    h_share = out[..., 4 * H:5 * H]
    return (h_out, c_out), (h_ner, h_re, h_share)


def pfn_unit_forward(x, h_in, c_in, prepared):
    """Eval-mode single-step PfnUnit forward (T == 1 case of the scan kernel)."""
    (h_out, c_out), (h_ner, h_re, h_share) = pfn_unit_scan(
        x[None], h_in, c_in, prepared)
    return (h_out[0], c_out[0]), (h_ner[0], h_re[0], h_share[0])


def _pfn_reference(x, h_in, c_in, params, dropconnect=0.1):
    """Pure-JAX reference matching the PyTorch forward (eval mode)."""
    w_in, b_in = params["input_transform"]
    w_h, b_h = params["hidden_transform"]
    w_t, b_t = params["transform"]
    gates = x @ w_in.T + b_in + h_in @ (w_h * (1.0 - dropconnect)).T + b_h
    c_raw, eg_cin, rg_cin, eg_c, rg_c = jnp.split(gates, 5, axis=1)

    def cumsoftmax(g):
        return jnp.cumsum(jax.nn.softmax(g, axis=-1), axis=-1)

    eg_cin = 1.0 - cumsoftmax(eg_cin)
    rg_cin = cumsoftmax(rg_cin)
    eg_c = 1.0 - cumsoftmax(eg_c)
    rg_c = cumsoftmax(rg_c)
    c = jnp.tanh(c_raw)
    overlap_c = rg_c * eg_c
    upper_c = rg_c - overlap_c
    downer_c = eg_c - overlap_c
    overlap_cin = rg_cin * eg_cin
    upper_cin = rg_cin - overlap_cin
    downer_cin = eg_cin - overlap_cin
    share = overlap_cin * c_in + overlap_c * c
    c_re = upper_cin * c_in + upper_c * c + share
    c_ner = downer_cin * c_in + downer_c * c + share
    c_share = share
    h_re = jnp.tanh(c_re)
    h_ner = jnp.tanh(c_ner)
    h_share = jnp.tanh(c_share)
    c_out = jnp.concatenate([c_re, c_ner, c_share], axis=-1) @ w_t.T + b_t
    h_out = jnp.tanh(c_out)
    return (h_out, c_out), (h_ner, h_re, h_share)


if __name__ == "__main__":
    B = 8            # batch
    IN = 16          # input_size
    H = 32           # hidden_size
    T = 6            # sequence length (in-kernel recurrence)
    DROP = 0.1
    TOL = 2e-3       # tightened from 5e-3 thanks to the Newton-refined recip

    key = jax.random.PRNGKey(0)
    ks = jax.random.split(key, 9)
    scale = 0.1
    params = {
        "input_transform": (scale * jax.random.normal(ks[0], (5 * H, IN), jnp.float32),
                            scale * jax.random.normal(ks[1], (5 * H,), jnp.float32)),
        "hidden_transform": (scale * jax.random.normal(ks[2], (5 * H, H), jnp.float32),
                             scale * jax.random.normal(ks[3], (5 * H,), jnp.float32)),
        "transform": (scale * jax.random.normal(ks[4], (H, 3 * H), jnp.float32),
                      scale * jax.random.normal(ks[5], (H,), jnp.float32)),
    }

    x_seq = jax.random.normal(ks[6], (T, B, IN), jnp.float32)
    h0 = jax.random.normal(ks[7], (B, H), jnp.float32)
    c0 = jax.random.normal(ks[8], (B, H), jnp.float32)

    # One-time weight prep (hoisted out of the per-call path).
    prepared = prepare_pfn_params(params, dropconnect=DROP)
    jax.block_until_ready(prepared)

    # --- single-step forward (T == 1 path), matches the module forward -------
    (h1, c1), (hn1, hr1, hs1) = pfn_unit_forward(x_seq[0], h0, c0, prepared)
    jax.block_until_ready((h1, c1, hn1, hr1, hs1))
    (h1_r, c1_r), (hn1_r, hr1_r, hs1_r) = _pfn_reference(
        x_seq[0], h0, c0, params, dropconnect=DROP)
    for got, ref in [(h1, h1_r), (c1, c1_r), (hn1, hn1_r),
                     (hr1, hr1_r), (hs1, hs1_r)]:
        assert jnp.allclose(got, ref, atol=TOL, rtol=TOL), "single-step mismatch"

    # --- full in-kernel recurrence over T steps -------------------------------
    (h_seq, c_seq), (hn_seq, hr_seq, hs_seq) = pfn_unit_scan(
        x_seq, h0, c0, prepared)
    jax.block_until_ready((h_seq, c_seq, hn_seq, hr_seq, hs_seq))

    h_ref, c_ref = h0, c0
    for t in range(T):
        (h_ref, c_ref), (hn_r, hr_r, hs_r) = _pfn_reference(
            x_seq[t], h_ref, c_ref, params, dropconnect=DROP)
        for got, ref in [(h_seq[t], h_ref), (c_seq[t], c_ref),
                         (hn_seq[t], hn_r), (hr_seq[t], hr_r),
                         (hs_seq[t], hs_r)]:
            assert jnp.allclose(got, ref, atol=TOL, rtol=TOL), \
                f"scan mismatch at step {t}"

    print("KERNEL_OK")
</pallas_src>

<mosaic_0001>
module attributes {stable_mosaic.version = 11 : i64} {
  func.func @_pfn_step_kernel(%arg0: i32, %arg1: memref<1x8x160xf32, #tpu.memory_space<vmem>>, %arg2: memref<32x160xf32, #tpu.memory_space<vmem>>, %arg3: memref<32x32xf32, #tpu.memory_space<vmem>>, %arg4: memref<96x32xf32, #tpu.memory_space<vmem>>, %arg5: memref<1x32xf32, #tpu.memory_space<vmem>>, %arg6: memref<8x32xf32, #tpu.memory_space<vmem>>, %arg7: memref<8x32xf32, #tpu.memory_space<vmem>>, %arg8: memref<1x8x160xf32, #tpu.memory_space<vmem>>, %arg9: memref<8x32xf32, #tpu.memory_space<vmem>>, %arg10: memref<8x32xf32, #tpu.memory_space<vmem>>) attributes {dimension_semantics = [#tpu.dimension_semantics<arbitrary>], iteration_bounds = array<i64: 1>, scalar_prefetch = 0 : i64, scratch_operands = 2 : i64, tpu.core_type = #tpu.core_type<tc>, window_params = [{transform_indices = @transform_0, window_bounds = array<i64: 1, 8, 160>}, {pipeline_mode = #tpu.pipeline_mode<synchronous>, transform_indices = @transform_1, window_bounds = array<i64: 32, 160>}, {pipeline_mode = #tpu.pipeline_mode<synchronous>, transform_indices = @transform_2, window_bounds = array<i64: 32, 32>}, {pipeline_mode = #tpu.pipeline_mode<synchronous>, transform_indices = @transform_3, window_bounds = array<i64: 96, 32>}, {pipeline_mode = #tpu.pipeline_mode<synchronous>, transform_indices = @transform_4, window_bounds = array<i64: 1, 32>}, {pipeline_mode = #tpu.pipeline_mode<synchronous>, transform_indices = @transform_5, window_bounds = array<i64: 8, 32>}, {pipeline_mode = #tpu.pipeline_mode<synchronous>, transform_indices = @transform_6, window_bounds = array<i64: 8, 32>}, {transform_indices = @transform_7, window_bounds = array<i64: 1, 8, 160>}]} {
    %c0_i32 = arith.constant 0 : i32
    %0 = arith.cmpi eq, %arg0, %c0_i32 : i32
    %1 = arith.extui %0 : i1 to i32
    %c0_i32_0 = arith.constant 0 : i32
    %2 = arith.cmpi ne, %1, %c0_i32_0 : i32
    scf.if %2 {
      %c0_30 = arith.constant 0 : index
      %c0_31 = arith.constant 0 : index
      %80 = vector.load %arg6[%c0_30, %c0_31] : memref<8x32xf32, #tpu.memory_space<vmem>>, vector<8x32xf32>
      %c0_32 = arith.constant 0 : index
      %c0_33 = arith.constant 0 : index
      %81 = vector.load %arg9[%c0_32, %c0_33] : memref<8x32xf32, #tpu.memory_space<vmem>>, vector<8x32xf32>
      tpu.vector_store %arg9[%c0_32, %c0_33], %80 {strides = array<i32>} : memref<8x32xf32, #tpu.memory_space<vmem>>, vector<8x32xf32>,
      %c0_34 = arith.constant 0 : index
      %c0_35 = arith.constant 0 : index
      %82 = vector.load %arg7[%c0_34, %c0_35] : memref<8x32xf32, #tpu.memory_space<vmem>>, vector<8x32xf32>
      %c0_36 = arith.constant 0 : index
      %c0_37 = arith.constant 0 : index
      %83 = vector.load %arg10[%c0_36, %c0_37] : memref<8x32xf32, #tpu.memory_space<vmem>>, vector<8x32xf32>
      tpu.vector_store %arg10[%c0_36, %c0_37], %82 {strides = array<i32>} : memref<8x32xf32, #tpu.memory_space<vmem>>, vector<8x32xf32>,
    } else {
    }
    %c0 = arith.constant 0 : index
    %c0_1 = arith.constant 0 : index
    %3 = vector.load %arg9[%c0, %c0_1] : memref<8x32xf32, #tpu.memory_space<vmem>>, vector<8x32xf32>
    %c0_2 = arith.constant 0 : index
    %c0_3 = arith.constant 0 : index
    %4 = vector.load %arg10[%c0_2, %c0_3] : memref<8x32xf32, #tpu.memory_space<vmem>>, vector<8x32xf32>
    %c0_4 = arith.constant 0 : index
    %c0_5 = arith.constant 0 : index
    %c0_6 = arith.constant 0 : index
    %5 = vector.load %arg1[%c0_4, %c0_5, %c0_6] : memref<1x8x160xf32, #tpu.memory_space<vmem>>, vector<1x8x160xf32>
    %6 = vector.shape_cast %5 : vector<1x8x160xf32> to vector<8x160xf32>
    %c0_7 = arith.constant 0 : index
    %c0_8 = arith.constant 0 : index
    %7 = vector.load %arg2[%c0_7, %c0_8] : memref<32x160xf32, #tpu.memory_space<vmem>>, vector<32x160xf32>
    %cst = arith.constant dense<0.000000e+00> : vector<8x160xf32>
    %8 = tpu.matmul %3, %7, %cst {dimension_numbers = #tpu.dot_dimension_numbers<[1], [0], [0], [1], [0, 0, 1, 1], [], []>} : vector<8x32xf32>, vector<32x160xf32>, vector<8x160xf32> -> vector<8x160xf32>
    %9 = arith.addf %6, %8 : vector<8x160xf32>
    %10 = vector.extract_strided_slice %9 {offsets = [0, 0], sizes = [8, 128], strides = [1, 1]} : vector<8x160xf32> to vector<8x128xf32>
    %11 = vector.extract_strided_slice %9 {offsets = [0, 128], sizes = [8, 32], strides = [1, 1]} : vector<8x160xf32> to vector<8x32xf32>
    %12 = vector.extract_strided_slice %10 {offsets = [0, 0], sizes = [8, 32], strides = [1, 1]} : vector<8x128xf32> to vector<8x32xf32>
    %13 = vector.extract_strided_slice %10 {offsets = [0, 32], sizes = [8, 32], strides = [1, 1]} : vector<8x128xf32> to vector<8x32xf32>
    %14 = vector.extract_strided_slice %10 {offsets = [0, 64], sizes = [8, 32], strides = [1, 1]} : vector<8x128xf32> to vector<8x32xf32>
    %15 = vector.extract_strided_slice %10 {offsets = [0, 96], sizes = [8, 32], strides = [1, 1]} : vector<8x128xf32> to vector<8x32xf32>
    %16 = tpu.concatenate %12, %13, %14, %15 in 0 : vector<8x32xf32>, vector<8x32xf32>, vector<8x32xf32>, vector<8x32xf32> -> vector<32x32xf32>
    %cst_9 = arith.constant dense<0xFF800000> : vector<32xf32>
    %17 = vector.multi_reduction <maximumf>, %16, %cst_9 [1] : vector<32x32xf32> to vector<32xf32>
    %18 = vector.shape_cast %17 : vector<32xf32> to vector<32x1xf32>
    %19 = vector.broadcast %18 : vector<32x1xf32> to vector<32x32xf32>
    %20 = arith.subf %16, %19 : vector<32x32xf32>
    %21 = math.exp %20 : vector<32x32xf32>
    %c0_10 = arith.constant 0 : index
    %c0_11 = arith.constant 0 : index
    %22 = vector.load %arg3[%c0_10, %c0_11] : memref<32x32xf32, #tpu.memory_space<vmem>>, vector<32x32xf32>
    %cst_12 = arith.constant dense<0.000000e+00> : vector<32x32xf32>
    %23 = tpu.matmul %21, %22, %cst_12 {dimension_numbers = #tpu.dot_dimension_numbers<[1], [0], [0], [1], [0, 0, 1, 1], [], []>} : vector<32x32xf32>, vector<32x32xf32>, vector<32x32xf32> -> vector<32x32xf32>
    %24 = vector.extract_strided_slice %23 {offsets = [0, 31], sizes = [32, 1], strides = [1, 1]} : vector<32x32xf32> to vector<32x1xf32>
    %25 = tpu.reciprocal %24 {approx = true} : vector<32x1xf32> -> vector<32x1xf32>
    %26 = arith.mulf %24, %25 : vector<32x1xf32>
    %cst_13 = arith.constant 2.000000e+00 : f32
    %27 = vector.broadcast %cst_13 : f32 to vector<32x1xf32>
    %28 = arith.subf %27, %26 : vector<32x1xf32>
    %29 = arith.mulf %25, %28 : vector<32x1xf32>
    %30 = vector.broadcast %29 : vector<32x1xf32> to vector<32x32xf32>
    %31 = arith.mulf %23, %30 : vector<32x32xf32>
    %32 = vector.extract_strided_slice %31 {offsets = [0, 0], sizes = [8, 32], strides = [1, 1]} : vector<32x32xf32> to vector<8x32xf32>
    %cst_14 = arith.constant 1.000000e+00 : f32
    %33 = vector.broadcast %cst_14 : f32 to vector<8x32xf32>
    %34 = arith.subf %33, %32 : vector<8x32xf32>
    %35 = vector.extract_strided_slice %31 {offsets = [8, 0], sizes = [8, 32], strides = [1, 1]} : vector<32x32xf32> to vector<8x32xf32>
    %36 = vector.extract_strided_slice %31 {offsets = [16, 0], sizes = [8, 32], strides = [1, 1]} : vector<32x32xf32> to vector<8x32xf32>
    %cst_15 = arith.constant 1.000000e+00 : f32
    %37 = vector.broadcast %cst_15 : f32 to vector<8x32xf32>
    %38 = arith.subf %37, %36 : vector<8x32xf32>
    %39 = vector.extract_strided_slice %31 {offsets = [24, 0], sizes = [8, 32], strides = [1, 1]} : vector<32x32xf32> to vector<8x32xf32>
    %40 = math.tanh %11 : vector<8x32xf32>
    %41 = arith.mulf %39, %38 : vector<8x32xf32>
    %42 = arith.subf %39, %41 : vector<8x32xf32>
    %43 = arith.subf %38, %41 : vector<8x32xf32>
    %44 = arith.mulf %35, %34 : vector<8x32xf32>
    %45 = arith.subf %35, %44 : vector<8x32xf32>
    %46 = arith.subf %34, %44 : vector<8x32xf32>
    %47 = arith.mulf %44, %4 : vector<8x32xf32>
    %48 = arith.mulf %41, %40 : vector<8x32xf32>
    %49 = arith.addf %47, %48 : vector<8x32xf32>
    %50 = arith.mulf %45, %4 : vector<8x32xf32>
    %51 = arith.mulf %42, %40 : vector<8x32xf32>
    %52 = arith.addf %50, %51 : vector<8x32xf32>
    %53 = arith.addf %52, %49 : vector<8x32xf32>
    %54 = arith.mulf %46, %4 : vector<8x32xf32>
    %55 = arith.mulf %43, %40 : vector<8x32xf32>
    %56 = arith.addf %54, %55 : vector<8x32xf32>
    %57 = arith.addf %56, %49 : vector<8x32xf32>
    %58 = math.tanh %53 : vector<8x32xf32>
    %59 = math.tanh %57 : vector<8x32xf32>
    %60 = math.tanh %49 : vector<8x32xf32>
    %c0_16 = arith.constant 0 : index
    %c0_17 = arith.constant 0 : index
    %61 = vector.load %arg4[%c0_16, %c0_17] : memref<96x32xf32, #tpu.memory_space<vmem>>, vector<96x32xf32>
    %62 = vector.extract_strided_slice %61 {offsets = [0, 0], sizes = [32, 32], strides = [1, 1]} : vector<96x32xf32> to vector<32x32xf32>
    %cst_18 = arith.constant dense<0.000000e+00> : vector<8x32xf32>
    %63 = tpu.matmul %53, %62, %cst_18 {dimension_numbers = #tpu.dot_dimension_numbers<[1], [0], [0], [1], [0, 0, 1, 1], [], []>} : vector<8x32xf32>, vector<32x32xf32>, vector<8x32xf32> -> vector<8x32xf32>
    %64 = vector.extract_strided_slice %61 {offsets = [32, 0], sizes = [32, 32], strides = [1, 1]} : vector<96x32xf32> to vector<32x32xf32>
    %cst_19 = arith.constant dense<0.000000e+00> : vector<8x32xf32>
    %65 = tpu.matmul %57, %64, %cst_19 {dimension_numbers = #tpu.dot_dimension_numbers<[1], [0], [0], [1], [0, 0, 1, 1], [], []>} : vector<8x32xf32>, vector<32x32xf32>, vector<8x32xf32> -> vector<8x32xf32>
    %66 = arith.addf %63, %65 : vector<8x32xf32>
    %67 = vector.extract_strided_slice %61 {offsets = [64, 0], sizes = [32, 32], strides = [1, 1]} : vector<96x32xf32> to vector<32x32xf32>
    %cst_20 = arith.constant dense<0.000000e+00> : vector<8x32xf32>
    %68 = tpu.matmul %49, %67, %cst_20 {dimension_numbers = #tpu.dot_dimension_numbers<[1], [0], [0], [1], [0, 0, 1, 1], [], []>} : vector<8x32xf32>, vector<32x32xf32>, vector<8x32xf32> -> vector<8x32xf32>
    %69 = arith.addf %66, %68 : vector<8x32xf32>
    %c0_21 = arith.constant 0 : index
    %c0_22 = arith.constant 0 : index
    %70 = vector.load %arg5[%c0_21, %c0_22] : memref<1x32xf32, #tpu.memory_space<vmem>>, vector<1x32xf32>
    %71 = vector.broadcast %70 : vector<1x32xf32> to vector<8x32xf32>
    %72 = arith.addf %69, %71 : vector<8x32xf32>
    %73 = math.tanh %72 : vector<8x32xf32>
    %74 = tpu.concatenate %73, %72, %59, %58, %60 in 1 : vector<8x32xf32>, vector<8x32xf32>, vector<8x32xf32>, vector<8x32xf32>, vector<8x32xf32> -> vector<8x160xf32>
    %c0_23 = arith.constant 0 : index
    %c0_24 = arith.constant 0 : index
    %c0_25 = arith.constant 0 : index
    %75 = vector.load %arg8[%c0_23, %c0_24, %c0_25] : memref<1x8x160xf32, #tpu.memory_space<vmem>>, vector<1x8x160xf32>
    %76 = vector.shape_cast %75 : vector<1x8x160xf32> to vector<8x160xf32>
    %77 = vector.shape_cast %74 : vector<8x160xf32> to vector<1x8x160xf32>
    tpu.vector_store %arg8[%c0_23, %c0_24, %c0_25], %77 {strides = array<i32>} : memref<1x8x160xf32, #tpu.memory_space<vmem>>, vector<1x8x160xf32>,
    %c0_26 = arith.constant 0 : index
    %c0_27 = arith.constant 0 : index
    %78 = vector.load %arg9[%c0_26, %c0_27] : memref<8x32xf32, #tpu.memory_space<vmem>>, vector<8x32xf32>
    tpu.vector_store %arg9[%c0_26, %c0_27], %73 {strides = array<i32>} : memref<8x32xf32, #tpu.memory_space<vmem>>, vector<8x32xf32>,
    %c0_28 = arith.constant 0 : index
    %c0_29 = arith.constant 0 : index
    %79 = vector.load %arg10[%c0_28, %c0_29] : memref<8x32xf32, #tpu.memory_space<vmem>>, vector<8x32xf32>
    tpu.vector_store %arg10[%c0_28, %c0_29], %72 {strides = array<i32>} : memref<8x32xf32, #tpu.memory_space<vmem>>, vector<8x32xf32>,
    return
  }
  func.func @transform_0(%arg0: i32) -> (i32, i32, i32) {
    %c0_i32 = arith.constant 0 : i32
    %c0_i32_0 = arith.constant 0 : i32
    %c0_i32_1 = arith.constant 0 : i32
    return %arg0, %c0_i32, %c0_i32_0 : i32, i32, i32
  }
  func.func @transform_1(%arg0: i32) -> (i32, i32) {
    %c0_i32 = arith.constant 0 : i32
    %c0_i32_0 = arith.constant 0 : i32
    %c0_i32_1 = arith.constant 0 : i32
    return %c0_i32, %c0_i32_0 : i32, i32
  }
  func.func @transform_2(%arg0: i32) -> (i32, i32) {
    %c0_i32 = arith.constant 0 : i32
    %c0_i32_0 = arith.constant 0 : i32
    %c0_i32_1 = arith.constant 0 : i32
    return %c0_i32, %c0_i32_0 : i32, i32
  }
  func.func @transform_3(%arg0: i32) -> (i32, i32) {
    %c0_i32 = arith.constant 0 : i32
    %c0_i32_0 = arith.constant 0 : i32
    %c0_i32_1 = arith.constant 0 : i32
    return %c0_i32, %c0_i32_0 : i32, i32
  }
  func.func @transform_4(%arg0: i32) -> (i32, i32) {
    %c0_i32 = arith.constant 0 : i32
    %c0_i32_0 = arith.constant 0 : i32
    %c0_i32_1 = arith.constant 0 : i32
    return %c0_i32, %c0_i32_0 : i32, i32
  }
  func.func @transform_5(%arg0: i32) -> (i32, i32) {
    %c0_i32 = arith.constant 0 : i32
    %c0_i32_0 = arith.constant 0 : i32
    %c0_i32_1 = arith.constant 0 : i32
    return %c0_i32, %c0_i32_0 : i32, i32
  }
  func.func @transform_6(%arg0: i32) -> (i32, i32) {
    %c0_i32 = arith.constant 0 : i32
    %c0_i32_0 = arith.constant 0 : i32
    %c0_i32_1 = arith.constant 0 : i32
    return %c0_i32, %c0_i32_0 : i32, i32
  }
  func.func @transform_7(%arg0: i32) -> (i32, i32, i32) {
    %c0_i32 = arith.constant 0 : i32
    %c0_i32_0 = arith.constant 0 : i32
    %c0_i32_1 = arith.constant 0 : i32
    return %arg0, %c0_i32, %c0_i32_0 : i32, i32, i32
  }
}

</mosaic_0001>

<llo_original>
// kernel: pfn_unit_scan.1
$region0: #{pfn_unit_scan.1}
  #allocation0 [shape = 'u32[]', space=smem, size = 0x4, offset = 0x4, fixed_abs, tag = 'smem constant byte address 0x4 - core index']
  #allocation1 [shape = 'u32[144,128]{1,0:T(1,128)}', space=vmem, size = 0x12000, scoped, tag = 'internal scratch']
  #allocation2 [shape = 'f32[8,32]{1,0:T(8,128)}', space=vmem, size = 0x1000, scoped, tag = 'scratch operand']
  #allocation3 [shape = 'f32[8,32]{1,0:T(8,128)}', space=vmem, size = 0x1000, scoped, tag = 'scratch operand']
  %s0 = inlined_call_operand.vmem [shape: f32[1,8,160], index: 0, kind: input, shape index: {}]
  %s1 = inlined_call_operand.vmem [shape: f32[32,160], index: 1, kind: input, shape index: {}]
  %s2 = inlined_call_operand.vmem [shape: f32[32,32], index: 2, kind: input, shape index: {}]
  %s3 = inlined_call_operand.vmem [shape: f32[96,32], index: 3, kind: input, shape index: {}]
  %s4 = inlined_call_operand.vmem [shape: f32[1,32], index: 4, kind: input, shape index: {}]
  %s5 = inlined_call_operand.vmem [shape: f32[8,32], index: 5, kind: input, shape index: {}]
  %s6 = inlined_call_operand.vmem [shape: f32[8,32], index: 6, kind: input, shape index: {}]
  %s7 = inlined_call_operand.vmem [shape: f32[1,8,160], index: 7, kind: output, shape index: {}]
  %s8 = sld [smem:[#allocation0]]
  $region42: #{pfn_unit_scan.1} parent=0
    _
  %s10 = ssub.s32 1, %s8
  %s11 = scalar_select 0, %s10, %s8
  // Predicated region
  $region2: #{pfn_unit_scan.1} parent=0 // pred_check
    _
  $region3: #{pfn_unit_scan.1} parent=0 // pred_check_branch
    %13 = sbr.rel (0) target = $region5
  $region4: #{pfn_unit_scan.1} parent=0 // pred_region
    _
  $region5: #{pfn_unit_scan.1} parent=0 // pred_fallthru
    _
  // Predicated region
  $region6: #{pfn_unit_scan.1} parent=0 // pred_check
    _
  $region7: #{pfn_unit_scan.1} parent=0 // pred_check_branch
    %15 = sbr.rel (0) target = $region9
  $region8: #{pfn_unit_scan.1} parent=0 // pred_region
    _
  $region9: #{pfn_unit_scan.1} parent=0 // pred_fallthru
    _
  // Predicated region
  $region10: #{pfn_unit_scan.1} parent=0 // pred_check
    _
  $region11: #{pfn_unit_scan.1} parent=0 // pred_check_branch
    %17 = sbr.rel (0) target = $region13
  $region12: #{pfn_unit_scan.1} parent=0 // pred_region
    _
  $region13: #{pfn_unit_scan.1} parent=0 // pred_fallthru
    _
  // Predicated region
  $region14: #{pfn_unit_scan.1} parent=0 // pred_check
    _
  $region15: #{pfn_unit_scan.1} parent=0 // pred_check_branch
    %19 = sbr.rel (0) target = $region17
  $region16: #{pfn_unit_scan.1} parent=0 // pred_region
    _
  $region17: #{pfn_unit_scan.1} parent=0 // pred_fallthru
    _
  // Predicated region
  $region18: #{pfn_unit_scan.1} parent=0 // pred_check
    _
  $region19: #{pfn_unit_scan.1} parent=0 // pred_check_branch
    %21 = sbr.rel (0) target = $region21
  $region20: #{pfn_unit_scan.1} parent=0 // pred_region
    _
  $region21: #{pfn_unit_scan.1} parent=0 // pred_fallthru
    _
  // Predicated region
  $region22: #{pfn_unit_scan.1} parent=0 // pred_check
    _
  $region23: #{pfn_unit_scan.1} parent=0 // pred_check_branch
    %23 = sbr.rel (0) target = $region25
  $region24: #{pfn_unit_scan.1} parent=0 // pred_region
    _
  $region25: #{pfn_unit_scan.1} parent=0 // pred_fallthru
    _
  // Predicated region
  $region26: #{pfn_unit_scan.1} parent=0 // pred_check
    _
  $region27: #{pfn_unit_scan.1} parent=0 // pred_check_branch
    %25 = sbr.rel (0) target = $region29
  $region28: #{pfn_unit_scan.1} parent=0 // pred_region
    _
  $region29: #{pfn_unit_scan.1} parent=0 // pred_fallthru
    _
  %p26 = scmp.eq.s32.totalorder 0, 0
  // Predicated region
  $region30: #{pfn_unit_scan.1} parent=0 // pred_check
    %p27 = pneg %p26
  $region31: #{pfn_unit_scan.1} parent=0 // pred_check_branch
    %29 = sbr.rel (%p27) target = $region33
  $region32: #{pfn_unit_scan.1} parent=0 // pred_region
    %v30 = vld [vmem:[%s5] sm:$0xff]
    %vm31 = vcmask 261120
    %32 = vst.msk [vmem:[#allocation2] sm:$0xff] %vm31, %v30
    %v33 = vld [vmem:[%s6] sm:$0xff]
    %34 = vst.msk [vmem:[#allocation3] sm:$0xff] %vm31, %v33
  $region33: #{pfn_unit_scan.1} parent=0 // pred_fallthru
    _
  %v35 = vld [vmem:[#allocation2] sm:$0xff]
  %v36 = vld [vmem:[#allocation3] sm:$0xff]
  %v37 = vld [vmem:[%s0] sm:$0xff]
  %v38 = vld [vmem:[%s0 + $0x8] sm:$0xff]
  %v39 = vld [vmem:[%s1] sm:$0xff]
  %v40 = vld [vmem:[%s1 + $0x8] sm:$0xff]
  %v41 = vld [vmem:[%s1 + $0x10] sm:$0xff]
  %v42 = vld [vmem:[%s1 + $0x18] sm:$0xff]
  %v43 = vld [vmem:[%s1 + $0x20] sm:$0xff]
  %v44 = vld [vmem:[%s1 + $0x28] sm:$0xff]
  %v45 = vld [vmem:[%s1 + $0x30] sm:$0xff]
  %v46 = vld [vmem:[%s1 + $0x38] sm:$0xff]
  %vm47 = vcmask 261120
  %v49 = vsel %vm47, %v35, 0
  %51 = vmatprep.subr.mxu0 %v40
  %52 = vmatpush1.msra.mxu0 %v39
  %53 = vmatprep.subr.mxu0 %v42
  %54 = vmatpush1.msra.mxu0 %v41
  %55 = vmatprep.subr.mxu0 %v44
  %56 = vmatpush1.msra.mxu0 %v43
  %57 = vmatprep.subr.mxu0 %v46
  %58 = vmatpush1.msra.mxu0 %v45
  %59 = vmatprep.subr.mxu0 0.0
  %60 = vmatpush1.msra.mxu0 0.0
  %61 = vmatprep.subr.mxu0 0.0
  %62 = vmatpush1.msra.mxu0 0.0
  %63 = vmatprep.subr.mxu0 0.0
  %64 = vmatpush1.msra.mxu0 0.0
  %65 = vmatprep.subr.mxu0 0.0
  %66 = vmatpush1.msra.mxu0 0.0
  %67 = vmatprep.subr.mxu0 0.0
  %68 = vmatpush1.msra.mxu0 0.0
  %69 = vmatprep.subr.mxu0 0.0
  %70 = vmatpush1.msra.mxu0 0.0
  %71 = vmatprep.subr.mxu0 0.0
  %72 = vmatpush1.msra.mxu0 0.0
  %73 = vmatprep.subr.mxu0 0.0
  %74 = vmatpush1.msra.mxu0 0.0
  %75 = vmatprep.subr.mxu0 0.0
  %76 = vmatpush1.msra.mxu0 0.0
  %77 = vmatprep.subr.mxu0 0.0
  %78 = vmatpush1.msra.mxu0 0.0
  %79 = vmatprep.subr.mxu0 0.0
  %80 = vmatpush1.msra.mxu0 0.0
  %81 = vmatprep.subr.mxu0 0.0
  %82 = vmatpush1.msra.mxu0 0.0
  %83 = vmatprep.subr.mxu0 0.0
  %84 = vmatpush1.msra.mxu0 0.0
  %85 = vmatprep.subr.mxu0 0.0
  %86 = vmatpush1.msra.mxu0 0.0
  %87 = vmatprep.subr.mxu0 0.0
  %88 = vmatpush1.msra.mxu0 0.0
  %89 = vmatprep.subr.mxu0 0.0
  %90 = vmatpush1.msra.mxu0 0.0
  %91 = vmatprep.subr.mxu0 0.0
  %92 = vmatpush1.msra.mxu0 0.0
  %93 = vmatprep.subr.mxu0 0.0
  %94 = vmatpush1.msra.mxu0 0.0
  %95 = vmatprep.subr.mxu0 0.0
  %96 = vmatpush1.msra.mxu0 0.0
  %97 = vmatprep.subr.mxu0 0.0
  %98 = vmatpush1.msra.mxu0 0.0
  %99 = vmatprep.subr.mxu0 0.0
  %100 = vmatpush1.msra.mxu0 0.0
  %101 = vmatprep.subr.mxu0 0.0
  %102 = vmatpush1.msra.mxu0 0.0
  %103 = vmatprep.subr.mxu0 0.0
  %104 = vmatpush1.msra.mxu0 0.0
  %105 = vmatprep.subr.mxu0 0.0
  %106 = vmatpush1.msra.mxu0 0.0
  %107 = vmatprep.subr.mxu0 0.0
  %108 = vmatpush1.msra.mxu0 0.0
  %109 = vmatprep.subr.mxu0 0.0
  %110 = vmatpush1.msra.mxu0 0.0
  %111 = vmatprep.subr.mxu0 0.0
  %112 = vmatpush1.msra.mxu0 0.0
  %113 = vmatprep.subr.mxu0 0.0
  %114 = vmatpush1.msra.mxu0 0.0
  %115 = vmatprep.mubr.f32.mxu0 0.0
  %116 = vmatmul.mubr.f32.gmra.mrb[0].mxu0 %v49
  %v117 = vpop.f32.mrb[0].mxu0
  %v118 = vadd.f32 0.0, %v117
  %v119 = vpop.f32.mrb[0].mxu0
  %v120 = vadd.f32 0.0, %v119
  %121 = vdwg.mxu0
  %v122 = vadd.f32 %v37, %v118
  %v123 = vadd.f32 %v38, %v120
  %125 = vrot.lane.b32.xlu0 %v122, 96
  %v126 = vpop.permute.xlu0 %125
  %128 = vrot.lane.b32.xlu0 %v122, 64
  %v129 = vpop.permute.xlu0 %128
  %131 = vrot.lane.b32.xlu0 %v122, 32
  %v132 = vpop.permute.xlu0 %131
  %v134 = vsel %vm47, %v122, -inf
  %135 = vmax.xlane.f32.xlu0 %v134
  %v136 = vpop.xlane.xlu0 %135
  %v137 = vsel %vm47, %v126, -inf
  %138 = vmax.xlane.f32.xlu0 %v137
  %v139 = vpop.xlane.xlu0 %138
  %v140 = vsel %vm47, %v129, -inf
  %141 = vmax.xlane.f32.xlu0 %v140
  %v142 = vpop.xlane.xlu0 %141
  %v143 = vsel %vm47, %v132, -inf
  %144 = vmax.xlane.f32.xlu0 %v143
  %v145 = vpop.xlane.xlu0 %144
  %v146 = vsub.f32 %v122, %v136
  %v147 = vsub.f32 %v126, %v139
  %v148 = vsub.f32 %v129, %v142
  %v149 = vsub.f32 %v132, %v145
  %v150 = vmul.f32 %v146, 1.442695
  %v151 = vpow.pop %v150
  %v152 = vmul.f32 %v147, 1.442695
  %v153 = vpow.pop %v152
  %v154 = vmul.f32 %v148, 1.442695
  %v155 = vpow.pop %v154
  %v156 = vmul.f32 %v149, 1.442695
  %v157 = vpow.pop %v156
  %v158 = vld [vmem:[%s2] sm:$0xff]
  %v159 = vld [vmem:[%s2 + $0x8] sm:$0xff]
  %v160 = vld [vmem:[%s2 + $0x10] sm:$0xff]
  %v161 = vld [vmem:[%s2 + $0x18] sm:$0xff]
  %v163 = vsel %vm47, %v151, 0
  %v166 = vsel %vm47, %v153, 0
  %v169 = vsel %vm47, %v155, 0
  %v172 = vsel %vm47, %v157, 0
  %174 = vmatprep.subr.mxu0 0.0
  %175 = vmatpush1.msra.mxu0 %v158
  %176 = vmatprep.subr.mxu0 0.0
  %177 = vmatpush1.msra.mxu0 %v159
  %178 = vmatprep.subr.mxu0 0.0
  %179 = vmatpush1.msra.mxu0 %v160
  %180 = vmatprep.subr.mxu0 0.0
  %181 = vmatpush1.msra.mxu0 %v161
  %182 = vmatprep.subr.mxu0 0.0
  %183 = vmatpush1.msra.mxu0 0.0
  %184 = vmatprep.subr.mxu0 0.0
  %185 = vmatpush1.msra.mxu0 0.0
  %186 = vmatprep.subr.mxu0 0.0
  %187 = vmatpush1.msra.mxu0 0.0
  %188 = vmatprep.subr.mxu0 0.0
  %189 = vmatpush1.msra.mxu0 0.0
  %190 = vmatprep.subr.mxu0 0.0
  %191 = vmatpush1.msra.mxu0 0.0
  %192 = vmatprep.subr.mxu0 0.0
  %193 = vmatpush1.msra.mxu0 0.0
  %194 = vmatprep.subr.mxu0 0.0
  %195 = vmatpush1.msra.mxu0 0.0
  %196 = vmatprep.subr.mxu0 0.0
  %197 = vmatpush1.msra.mxu0 0.0
  %198 = vmatprep.subr.mxu0 0.0
  %199 = vmatpush1.msra.mxu0 0.0
  %200 = vmatprep.subr.mxu0 0.0
  %201 = vmatpush1.msra.mxu0 0.0
  %202 = vmatprep.subr.mxu0 0.0
  %203 = vmatpush1.msra.mxu0 0.0
  %204 = vmatprep.subr.mxu0 0.0
  %205 = vmatpush1.msra.mxu0 0.0
  %206 = vmatprep.subr.mxu0 0.0
  %207 = vmatpush1.msra.mxu0 0.0
  %208 = vmatprep.subr.mxu0 0.0
  %209 = vmatpush1.msra.mxu0 0.0
  %210 = vmatprep.subr.mxu0 0.0
  %211 = vmatpush1.msra.mxu0 0.0
  %212 = vmatprep.subr.mxu0 0.0
  %213 = vmatpush1.msra.mxu0 0.0
  %214 = vmatprep.subr.mxu0 0.0
  %215 = vmatpush1.msra.mxu0 0.0
  %216 = vmatprep.subr.mxu0 0.0
  %217 = vmatpush1.msra.mxu0 0.0
  %218 = vmatprep.subr.mxu0 0.0
  %219 = vmatpush1.msra.mxu0 0.0
  %220 = vmatprep.subr.mxu0 0.0
  %221 = vmatpush1.msra.mxu0 0.0
  %222 = vmatprep.subr.mxu0 0.0
  %223 = vmatpush1.msra.mxu0 0.0
  %224 = vmatprep.subr.mxu0 0.0
  %225 = vmatpush1.msra.mxu0 0.0
  %226 = vmatprep.subr.mxu0 0.0
  %227 = vmatpush1.msra.mxu0 0.0
  %228 = vmatprep.subr.mxu0 0.0
  %229 = vmatpush1.msra.mxu0 0.0
  %230 = vmatprep.subr.mxu0 0.0
  %231 = vmatpush1.msra.mxu0 0.0
  %232 = vmatprep.subr.mxu0 0.0
  %233 = vmatpush1.msra.mxu0 0.0
  %234 = vmatprep.subr.mxu0 0.0
  %235 = vmatpush1.msra.mxu0 0.0
  %236 = vmatprep.subr.mxu0 0.0
  %237 = vmatpush1.msra.mxu0 0.0
  %238 = vmatprep.mubr.f32.mxu0 0.0
  %239 = vmatmul.mubr.f32.gmra.mrb[0].mxu0 %v163
  %v240 = vpop.f32.mrb[0].mxu0
  %v241 = vadd.f32 0.0, %v240
  %v242 = vpop.f32.mrb[0].mxu0
  %243 = vmatprep.mubr.f32.mxu0 0.0
  %244 = vmatmul.mubr.f32.gmra.mrb[0].mxu0 %v166
  %v245 = vpop.f32.mrb[0].mxu0
  %v246 = vadd.f32 0.0, %v245
  %v247 = vpop.f32.mrb[0].mxu0
  %248 = vmatprep.mubr.f32.mxu0 0.0
  %249 = vmatmul.mubr.f32.gmra.mrb[0].mxu0 %v169
  %v250 = vpop.f32.mrb[0].mxu0
  %v251 = vadd.f32 0.0, %v250
  %v252 = vpop.f32.mrb[0].mxu0
  %253 = vmatprep.mubr.f32.mxu0 0.0
  %254 = vmatmul.mubr.f32.gmra.mrb[0].mxu0 %v172
  %v255 = vpop.f32.mrb[0].mxu0
  %v256 = vadd.f32 0.0, %v255
  %v257 = vpop.f32.mrb[0].mxu0
  %258 = vdwg.mxu0
  %v259 = vrcp.pop %v241
  %v260 = vrcp.pop %v246
  %v261 = vrcp.pop %v251
  %v262 = vrcp.pop %v256
  %v263 = vmul.f32 %v241, %v259
  %v264 = vmul.f32 %v246, %v260
  %v265 = vmul.f32 %v251, %v261
  %v266 = vmul.f32 %v256, %v262
  %v267 = vsub.f32 2.0, %v263
  %v268 = vsub.f32 2.0, %v264
  %v269 = vsub.f32 2.0, %v265
  %v270 = vsub.f32 2.0, %v266
  %v271 = vmul.f32 %v259, %v267
  %v272 = vmul.f32 %v260, %v268
  %v273 = vmul.f32 %v261, %v269
  %v274 = vmul.f32 %v262, %v270
  %276 = vset.pattern.permute.xlu0 31
  %277 = vperm.xlu0 %276, %v271
  %v278 = vpop.permute.xlu0 %277
  %281 = vset.pattern.permute.xlu0 31
  %282 = vperm.xlu0 %281, %v272
  %v283 = vpop.permute.xlu0 %282
  %286 = vset.pattern.permute.xlu0 31
  %287 = vperm.xlu0 %286, %v273
  %v288 = vpop.permute.xlu0 %287
  %291 = vset.pattern.permute.xlu0 31
  %292 = vperm.xlu0 %291, %v274
  %v293 = vpop.permute.xlu0 %292
  %v295 = vmul.f32 %v241, %v278
  %v296 = vmul.f32 %v246, %v283
  %v297 = vmul.f32 %v251, %v288
  %v298 = vmul.f32 %v256, %v293
  %v299 = vsub.f32 1.0, %v295
  %v300 = vsub.f32 1.0, %v297
  %v301 = vtanh.pop %v123
  %v302 = vmul.f32 %v298, %v300
  %v303 = vsub.f32 %v298, %v302
  %v304 = vsub.f32 %v300, %v302
  %v305 = vmul.f32 %v296, %v299
  %v306 = vsub.f32 %v296, %v305
  %v307 = vsub.f32 %v299, %v305
  %v308 = vmul.f32 %v305, %v36
  %v309 = vmul.f32 %v302, %v301
  %v310 = vadd.f32 %v308, %v309
  %v311 = vmul.f32 %v306, %v36
  %v312 = vmul.f32 %v303, %v301
  %v313 = vadd.f32 %v311, %v312
  %v314 = vadd.f32 %v313, %v310
  %v315 = vmul.f32 %v307, %v36
  %v316 = vmul.f32 %v304, %v301
  %v317 = vadd.f32 %v315, %v316
  %v318 = vadd.f32 %v317, %v310
  %v319 = vtanh.pop %v314
  %v320 = vtanh.pop %v318
  %v321 = vtanh.pop %v310
  %v322 = vld [vmem:[%s3] sm:$0xff]
  %v323 = vld [vmem:[%s3 + $0x8] sm:$0xff]
  %v324 = vld [vmem:[%s3 + $0x10] sm:$0xff]
  %v325 = vld [vmem:[%s3 + $0x18] sm:$0xff]
  %v326 = vld [vmem:[%s3 + $0x20] sm:$0xff]
  %v327 = vld [vmem:[%s3 + $0x28] sm:$0xff]
  %v328 = vld [vmem:[%s3 + $0x30] sm:$0xff]
  %v329 = vld [vmem:[%s3 + $0x38] sm:$0xff]
  %v330 = vld [vmem:[%s3 + $0x40] sm:$0xff]
  %v331 = vld [vmem:[%s3 + $0x48] sm:$0xff]
  %v332 = vld [vmem:[%s3 + $0x50] sm:$0xff]
  %v333 = vld [vmem:[%s3 + $0x58] sm:$0xff]
  %v335 = vsel %vm47, %v318, 0
  %337 = vmatprep.subr.mxu0 0.0
  %338 = vmatpush1.msra.mxu0 %v326
  %339 = vmatprep.subr.mxu0 0.0
  %340 = vmatpush1.msra.mxu0 %v327
  %341 = vmatprep.subr.mxu0 0.0
  %342 = vmatpush1.msra.mxu0 %v328
  %343 = vmatprep.subr.mxu0 0.0
  %344 = vmatpush1.msra.mxu0 %v329
  %345 = vmatprep.subr.mxu0 0.0
  %346 = vmatpush1.msra.mxu0 0.0
  %347 = vmatprep.subr.mxu0 0.0
  %348 = vmatpush1.msra.mxu0 0.0
  %349 = vmatprep.subr.mxu0 0.0
  %350 = vmatpush1.msra.mxu0 0.0
  %351 = vmatprep.subr.mxu0 0.0
  %352 = vmatpush1.msra.mxu0 0.0
  %353 = vmatprep.subr.mxu0 0.0
  %354 = vmatpush1.msra.mxu0 0.0
  %355 = vmatprep.subr.mxu0 0.0
  %356 = vmatpush1.msra.mxu0 0.0
  %357 = vmatprep.subr.mxu0 0.0
  %358 = vmatpush1.msra.mxu0 0.0
  %359 = vmatprep.subr.mxu0 0.0
  %360 = vmatpush1.msra.mxu0 0.0
  %361 = vmatprep.subr.mxu0 0.0
  %362 = vmatpush1.msra.mxu0 0.0
  %363 = vmatprep.subr.mxu0 0.0
  %364 = vmatpush1.msra.mxu0 0.0
  %365 = vmatprep.subr.mxu0 0.0
  %366 = vmatpush1.msra.mxu0 0.0
  %367 = vmatprep.subr.mxu0 0.0
  %368 = vmatpush1.msra.mxu0 0.0
  %369 = vmatprep.subr.mxu0 0.0
  %370 = vmatpush1.msra.mxu0 0.0
  %371 = vmatprep.subr.mxu0 0.0
  %372 = vmatpush1.msra.mxu0 0.0
  %373 = vmatprep.subr.mxu0 0.0
  %374 = vmatpush1.msra.mxu0 0.0
  %375 = vmatprep.subr.mxu0 0.0
  %376 = vmatpush1.msra.mxu0 0.0
  %377 = vmatprep.subr.mxu0 0.0
  %378 = vmatpush1.msra.mxu0 0.0
  %379 = vmatprep.subr.mxu0 0.0
  %380 = vmatpush1.msra.mxu0 0.0
  %381 = vmatprep.subr.mxu0 0.0
  %382 = vmatpush1.msra.mxu0 0.0
  %383 = vmatprep.subr.mxu0 0.0
  %384 = vmatpush1.msra.mxu0 0.0
  %385 = vmatprep.subr.mxu0 0.0
  %386 = vmatpush1.msra.mxu0 0.0
  %387 = vmatprep.subr.mxu0 0.0
  %388 = vmatpush1.msra.mxu0 0.0
  %389 = vmatprep.subr.mxu0 0.0
  %390 = vmatpush1.msra.mxu0 0.0
  %391 = vmatprep.subr.mxu0 0.0
  %392 = vmatpush1.msra.mxu0 0.0
  %393 = vmatprep.subr.mxu0 0.0
  %394 = vmatpush1.msra.mxu0 0.0
  %395 = vmatprep.subr.mxu0 0.0
  %396 = vmatpush1.msra.mxu0 0.0
  %397 = vmatprep.subr.mxu0 0.0
  %398 = vmatpush1.msra.mxu0 0.0
  %399 = vmatprep.subr.mxu0 0.0
  %400 = vmatpush1.msra.mxu0 0.0
  %401 = vmatprep.mubr.f32.mxu0 0.0
  %402 = vmatmul.mubr.f32.gmra.mrb[0].mxu0 %v335
  %v403 = vpop.f32.mrb[0].mxu0
  %v404 = vadd.f32 0.0, %v403
  %v405 = vpop.f32.mrb[0].mxu0
  %406 = vdwg.mxu0
  %v408 = vsel %vm47, %v314, 0
  %410 = vmatprep.subr.mxu0 0.0
  %411 = vmatpush1.msra.mxu0 %v322
  %412 = vmatprep.subr.mxu0 0.0
  %413 = vmatpush1.msra.mxu0 %v323
  %414 = vmatprep.subr.mxu0 0.0
  %415 = vmatpush1.msra.mxu0 %v324
  %416 = vmatprep.subr.mxu0 0.0
  %417 = vmatpush1.msra.mxu0 %v325
  %418 = vmatprep.subr.mxu0 0.0
  %419 = vmatpush1.msra.mxu0 0.0
  %420 = vmatprep.subr.mxu0 0.0
  %421 = vmatpush1.msra.mxu0 0.0
  %422 = vmatprep.subr.mxu0 0.0
  %423 = vmatpush1.msra.mxu0 0.0
  %424 = vmatprep.subr.mxu0 0.0
  %425 = vmatpush1.msra.mxu0 0.0
  %426 = vmatprep.subr.mxu0 0.0
  %427 = vmatpush1.msra.mxu0 0.0
  %428 = vmatprep.subr.mxu0 0.0
  %429 = vmatpush1.msra.mxu0 0.0
  %430 = vmatprep.subr.mxu0 0.0
  %431 = vmatpush1.msra.mxu0 0.0
  %432 = vmatprep.subr.mxu0 0.0
  %433 = vmatpush1.msra.mxu0 0.0
  %434 = vmatprep.subr.mxu0 0.0
  %435 = vmatpush1.msra.mxu0 0.0
  %436 = vmatprep.subr.mxu0 0.0
  %437 = vmatpush1.msra.mxu0 0.0
  %438 = vmatprep.subr.mxu0 0.0
  %439 = vmatpush1.msra.mxu0 0.0
  %440 = vmatprep.subr.mxu0 0.0
  %441 = vmatpush1.msra.mxu0 0.0
  %442 = vmatprep.subr.mxu0 0.0
  %443 = vmatpush1.msra.mxu0 0.0
  %444 = vmatprep.subr.mxu0 0.0
  %445 = vmatpush1.msra.mxu0 0.0
  %446 = vmatprep.subr.mxu0 0.0
  %447 = vmatpush1.msra.mxu0 0.0
  %448 = vmatprep.subr.mxu0 0.0
  %449 = vmatpush1.msra.mxu0 0.0
  %450 = vmatprep.subr.mxu0 0.0
  %451 = vmatpush1.msra.mxu0 0.0
  %452 = vmatprep.subr.mxu0 0.0
  %453 = vmatpush1.msra.mxu0 0.0
  %454 = vmatprep.subr.mxu0 0.0
  %455 = vmatpush1.msra.mxu0 0.0
  %456 = vmatprep.subr.mxu0 0.0
  %457 = vmatpush1.msra.mxu0 0.0
  %458 = vmatprep.subr.mxu0 0.0
  %459 = vmatpush1.msra.mxu0 0.0
  %460 = vmatprep.subr.mxu0 0.0
  %461 = vmatpush1.msra.mxu0 0.0
  %462 = vmatprep.subr.mxu0 0.0
  %463 = vmatpush1.msra.mxu0 0.0
  %464 = vmatprep.subr.mxu0 0.0
  %465 = vmatpush1.msra.mxu0 0.0
  %466 = vmatprep.subr.mxu0 0.0
  %467 = vmatpush1.msra.mxu0 0.0
  %468 = vmatprep.subr.mxu0 0.0
  %469 = vmatpush1.msra.mxu0 0.0
  %470 = vmatprep.subr.mxu0 0.0
  %471 = vmatpush1.msra.mxu0 0.0
  %472 = vmatprep.subr.mxu0 0.0
  %473 = vmatpush1.msra.mxu0 0.0
  %474 = vmatprep.mubr.f32.mxu0 0.0
  %475 = vmatmul.mubr.f32.gmra.mrb[0].mxu0 %v408
  %v476 = vpop.f32.mrb[0].mxu0
  %v477 = vadd.f32 %v404, %v476
  %v478 = vpop.f32.mrb[0].mxu0
  %479 = vdwg.mxu0
  %v481 = vsel %vm47, %v310, 0
  %483 = vmatprep.subr.mxu0 0.0
  %484 = vmatpush1.msra.mxu0 %v330
  %485 = vmatprep.subr.mxu0 0.0
  %486 = vmatpush1.msra.mxu0 %v331
  %487 = vmatprep.subr.mxu0 0.0
  %488 = vmatpush1.msra.mxu0 %v332
  %489 = vmatprep.subr.mxu0 0.0
  %490 = vmatpush1.msra.mxu0 %v333
  %491 = vmatprep.subr.mxu0 0.0
  %492 = vmatpush1.msra.mxu0 0.0
  %493 = vmatprep.subr.mxu0 0.0
  %494 = vmatpush1.msra.mxu0 0.0
  %495 = vmatprep.subr.mxu0 0.0
  %496 = vmatpush1.msra.mxu0 0.0
  %497 = vmatprep.subr.mxu0 0.0
  %498 = vmatpush1.msra.mxu0 0.0
  %499 = vmatprep.subr.mxu0 0.0
  %500 = vmatpush1.msra.mxu0 0.0
  %501 = vmatprep.subr.mxu0 0.0
  %502 = vmatpush1.msra.mxu0 0.0
  %503 = vmatprep.subr.mxu0 0.0
  %504 = vmatpush1.msra.mxu0 0.0
  %505 = vmatprep.subr.mxu0 0.0
  %506 = vmatpush1.msra.mxu0 0.0
  %507 = vmatprep.subr.mxu0 0.0
  %508 = vmatpush1.msra.mxu0 0.0
  %509 = vmatprep.subr.mxu0 0.0
  %510 = vmatpush1.msra.mxu0 0.0
  %511 = vmatprep.subr.mxu0 0.0
  %512 = vmatpush1.msra.mxu0 0.0
  %513 = vmatprep.subr.mxu0 0.0
  %514 = vmatpush1.msra.mxu0 0.0
  %515 = vmatprep.subr.mxu0 0.0
  %516 = vmatpush1.msra.mxu0 0.0
  %517 = vmatprep.subr.mxu0 0.0
  %518 = vmatpush1.msra.mxu0 0.0
  %519 = vmatprep.subr.mxu0 0.0
  %520 = vmatpush1.msra.mxu0 0.0
  %521 = vmatprep.subr.mxu0 0.0
  %522 = vmatpush1.msra.mxu0 0.0
  %523 = vmatprep.subr.mxu0 0.0
  %524 = vmatpush1.msra.mxu0 0.0
  %525 = vmatprep.subr.mxu0 0.0
  %526 = vmatpush1.msra.mxu0 0.0
  %527 = vmatprep.subr.mxu0 0.0
  %528 = vmatpush1.msra.mxu0 0.0
  %529 = vmatprep.subr.mxu0 0.0
  %530 = vmatpush1.msra.mxu0 0.0
  %531 = vmatprep.subr.mxu0 0.0
  %532 = vmatpush1.msra.mxu0 0.0
  %533 = vmatprep.subr.mxu0 0.0
  %534 = vmatpush1.msra.mxu0 0.0
  %535 = vmatprep.subr.mxu0 0.0
  %536 = vmatpush1.msra.mxu0 0.0
  %537 = vmatprep.subr.mxu0 0.0
  %538 = vmatpush1.msra.mxu0 0.0
  %539 = vmatprep.subr.mxu0 0.0
  %540 = vmatpush1.msra.mxu0 0.0
  %541 = vmatprep.subr.mxu0 0.0
  %542 = vmatpush1.msra.mxu0 0.0
  %543 = vmatprep.subr.mxu0 0.0
  %544 = vmatpush1.msra.mxu0 0.0
  %545 = vmatprep.subr.mxu0 0.0
  %546 = vmatpush1.msra.mxu0 0.0
  %547 = vmatprep.mubr.f32.mxu0 0.0
  %548 = vmatmul.mubr.f32.gmra.mrb[0].mxu0 %v481
  %v549 = vpop.f32.mrb[0].mxu0
  %v550 = vadd.f32 0.0, %v549
  %v551 = vpop.f32.mrb[0].mxu0
  %552 = vdwg.mxu0
  %v553 = vadd.f32 %v477, %v550
  %v554 = vld [vmem:[%s4] sm:$0x1]
  %v556 = vlaneseq
  %v557 = vshrl.u32 %v556, 7
  %v558 = vsub.s32 0, %v557
  %v559 = vrot.slane %v554, %v558
  %v561 = vadd.f32 %v553, %v559
  %v562 = vtanh.pop %v561
  %564 = vrot.lane.b32.xlu0 %v561, 32
  %v565 = vpop.permute.xlu0 %564
  %568 = vrot.lane.b32.xlu0 %v320, 64
  %v569 = vpop.permute.xlu0 %568
  %572 = vrot.lane.b32.xlu0 %v319, 96
  %v573 = vpop.permute.xlu0 %572
  %v575 = vsel %vm47, %v562, %v565
  %vm576 = vcmask 523264
  %v577 = vsel %vm576, %v575, %v569
  %vm578 = vcmask 785408
  %v579 = vsel %vm578, %v577, %v573
  %580 = vst [vmem:[%s7] sm:$0xff] %v579
  %581 = vst.msk [vmem:[%s7 + $0x8] sm:$0xff] %vm47, %v321
  %582 = vst.msk [vmem:[#allocation2] sm:$0xff] %vm47, %v562
  %583 = vst.msk [vmem:[#allocation3] sm:$0xff] %vm47, %v561
  // Predicated region
  $region34: #{pfn_unit_scan.1} parent=0 // pred_check
    _
  $region35: #{pfn_unit_scan.1} parent=0 // pred_check_branch
    %585 = sbr.rel (0) target = $region37
  $region36: #{pfn_unit_scan.1} parent=0 // pred_region
    _
  $region37: #{pfn_unit_scan.1} parent=0 // pred_fallthru
    _
  // Predicated region
  $region38: #{pfn_unit_scan.1} parent=0 // pred_check
    _
  $region39: #{pfn_unit_scan.1} parent=0 // pred_check_branch
    %587 = sbr.rel (0) target = $region41
  $region40: #{pfn_unit_scan.1} parent=0 // pred_region
    _
  $region41: #{pfn_unit_scan.1} parent=0 // pred_fallthru
    _

</llo_original>
